<compile_context>
chip_gen: v7x
topology: tpu7x:2x2x1
jax: 0.10.0
libtpu: 0.0.40
codegen_flags: <defaults>
</compile_context>

<pallas_src>
import jax
import jax.numpy as jnp
from jax.experimental import pallas as pl
from jax.experimental.pallas import tpu as pltpu

N_PAD = 128    # lane-dense padding of the output-feature dim (96 -> 128)
BM_MAX = 512   # M tile: 512*896*4B x-block * 2 (double buffer) ~= 3.5 MiB, safe on v5e/v7x


def linear_clamp_kernel(x_ref, w_ref, b_ref, o_ref):
    # x arrives f32 and is narrowed to bf16 on the VPU (kernel is DMA-bound, VALU idle);
    # weights are pre-formatted bf16; MXU accumulates in f32; epilogue stays f32.
    x_bf = x_ref[...].astype(jnp.bfloat16)
    acc = jnp.dot(x_bf, w_ref[...], preferred_element_type=jnp.float32)
    acc = acc + b_ref[...]                      # (BM, Np) + (1, Np) broadcast
    acc = jnp.maximum(acc, 0.0)                 # clamp_min(., 0)
    acc = jnp.minimum(acc, 0.5)                 # clamp_max(., 0.5)
    o_ref[...] = acc.astype(o_ref.dtype)


def prepare_params(w, b):
    """One-time parameter prep. Call at init, NOT in the per-step path.

    w: (N, K) PyTorch layout f32; b: (N,) f32.
    Returns (w_t, b_p): (K, N_PAD) bf16 transposed weight, (1, N_PAD) f32 bias.

    INVARIANT: padded lanes [:, N:] of both are zero, so the padded output
    columns clamp to 0 and are dropped by the wrapper's [:, :N] slice.
    """
    N, K = w.shape
    assert N <= N_PAD
    w_t = jnp.zeros((K, N_PAD), jnp.bfloat16).at[:, :N].set(w.T.astype(jnp.bfloat16))
    b_p = jnp.zeros((1, N_PAD), jnp.float32).at[:, :N].set(b.astype(jnp.float32))
    return w_t, b_p


def linear_clamp(x, w_t, b_p, n_out):
    """x: (M, K) f32; (w_t, b_p) from prepare_params(). Returns (M, n_out) f32."""
    M, K = x.shape
    Kw, Np = w_t.shape
    assert Kw == K and Np == N_PAD and n_out <= Np

    bm = M if M <= BM_MAX else BM_MAX
    grid = (pl.cdiv(M, bm),)

    # TODO(synk): for a per-decode-step loop (M == 1), keep w_t resident in VMEM
    # across calls (cross-call prefetch: SEMAPHORE+VMEM outputs) or fuse this
    # matmul+clamp into the caller's kernel; within a single call the weight
    # block below is already VMEM-resident across all M tiles.
    out_padded = pl.pallas_call(
        linear_clamp_kernel,
        out_shape=jax.ShapeDtypeStruct((M, Np), jnp.float32),
        grid=grid,
        in_specs=[
            pl.BlockSpec((bm, K), lambda i: (i, 0)),   # x: tiled over M
            pl.BlockSpec((K, Np), lambda i: (0, 0)),   # w_t: resident across M tiles
            pl.BlockSpec((1, Np), lambda i: (0, 0)),   # bias: resident
        ],
        out_specs=pl.BlockSpec((bm, Np), lambda i: (i, 0)),
        compiler_params=pltpu.CompilerParams(
            dimension_semantics=("parallel",),         # shard M tiles across TCs (v7x)
        ),
        cost_estimate=pl.CostEstimate(
            flops=2 * M * K * n_out,
            transcendentals=0,
            bytes_accessed=(M * K * 4) + (K * Np * 2) + (Np * 4) + (M * Np * 4),
        ),
    )(x, w_t, b_p)

    return out_padded[:, :n_out]


if __name__ == "__main__":
    key = jax.random.PRNGKey(0)
    kx, kw, kb = jax.random.split(key, 3)

    in_features, out_features = 896, 96

    # Deterministic parameter init mimicking nn.Linear's U(-1/sqrt(K), 1/sqrt(K)).
    bound = 1.0 / (in_features ** 0.5)
    w = jax.random.uniform(kw, (out_features, in_features), jnp.float32,
                           minval=-bound, maxval=bound)        # PyTorch layout (N, K)
    b = jax.random.uniform(kb, (out_features,), jnp.float32,
                           minval=-bound, maxval=bound)

    # Hoisted one-time parameter prep (outside the per-call path).
    w_t, b_p = prepare_params(w, b)
    w_t, b_p = jax.block_until_ready((w_t, b_p))

    x1 = jax.random.normal(kx, (1, in_features), jnp.float32)

    out = linear_clamp(x1, w_t, b_p, out_features)
    out = jax.block_until_ready(out)
    assert out.shape == (1, out_features)

    # Reference in plain JAX with the same bf16 operand rounding (f32 accumulate).
    x_bf = x1.astype(jnp.bfloat16).astype(jnp.float32)
    w_bf = w.astype(jnp.bfloat16).astype(jnp.float32)
    ref_bf16 = jnp.clip(x_bf @ w_bf.T + b, 0.0, 0.5)
    assert jnp.allclose(out, ref_bf16, atol=1e-3, rtol=1e-3)

    # Sanity vs. the full-f32 reference (looser tolerance due to bf16 operands).
    ref_f32 = jnp.clip(x1 @ w.T + b, 0.0, 0.5)
    assert jnp.allclose(out, ref_f32, atol=2e-2, rtol=2e-2)

    print("KERNEL_OK")
</pallas_src>

<mosaic_0001>
module attributes {stable_mosaic.version = 11 : i64} {
  func.func @linear_clamp_kernel(%arg0: i32, %arg1: memref<1x896xf32, #tpu.memory_space<vmem>>, %arg2: memref<896x128xbf16, #tpu.memory_space<vmem>>, %arg3: memref<1x128xf32, #tpu.memory_space<vmem>>, %arg4: memref<1x128xf32, #tpu.memory_space<vmem>>) attributes {dimension_semantics = [#tpu.dimension_semantics<parallel>], iteration_bounds = array<i64: 1>, scalar_prefetch = 0 : i64, scratch_operands = 0 : i64, tpu.core_type = #tpu.core_type<tc>, window_params = [{transform_indices = @transform_0, window_bounds = array<i64: 1, 896>}, {pipeline_mode = #tpu.pipeline_mode<synchronous>, transform_indices = @transform_1, window_bounds = array<i64: 896, 128>}, {pipeline_mode = #tpu.pipeline_mode<synchronous>, transform_indices = @transform_2, window_bounds = array<i64: 1, 128>}, {transform_indices = @transform_3, window_bounds = array<i64: 1, 128>}]} {
    %c0 = arith.constant 0 : index
    %c0_0 = arith.constant 0 : index
    %0 = vector.load %arg1[%c0, %c0_0] : memref<1x896xf32, #tpu.memory_space<vmem>>, vector<1x896xf32>
    %1 = arith.truncf %0 : vector<1x896xf32> to vector<1x896xbf16>
    %c0_1 = arith.constant 0 : index
    %c0_2 = arith.constant 0 : index
    %2 = vector.load %arg2[%c0_1, %c0_2] : memref<896x128xbf16, #tpu.memory_space<vmem>>, vector<896x128xbf16>
    %cst = arith.constant dense<0.000000e+00> : vector<1x128xf32>
    %3 = tpu.matmul %1, %2, %cst {dimension_numbers = #tpu.dot_dimension_numbers<[1], [0], [0], [1], [0, 0, 1, 1], [], []>} : vector<1x896xbf16>, vector<896x128xbf16>, vector<1x128xf32> -> vector<1x128xf32>
    %c0_3 = arith.constant 0 : index
    %c0_4 = arith.constant 0 : index
    %4 = vector.load %arg3[%c0_3, %c0_4] : memref<1x128xf32, #tpu.memory_space<vmem>>, vector<1x128xf32>
    %5 = arith.addf %3, %4 : vector<1x128xf32>
    %cst_5 = arith.constant 0.000000e+00 : f32
    %6 = vector.broadcast %cst_5 : f32 to vector<1x128xf32>
    %7 = arith.maximumf %5, %6 : vector<1x128xf32>
    %cst_6 = arith.constant 5.000000e-01 : f32
    %8 = vector.broadcast %cst_6 : f32 to vector<1x128xf32>
    %9 = arith.minimumf %7, %8 : vector<1x128xf32>
    %c0_7 = arith.constant 0 : index
    %c0_8 = arith.constant 0 : index
    %10 = vector.load %arg4[%c0_7, %c0_8] : memref<1x128xf32, #tpu.memory_space<vmem>>, vector<1x128xf32>
    tpu.vector_store %arg4[%c0_7, %c0_8], %9 {strides = array<i32>} : memref<1x128xf32, #tpu.memory_space<vmem>>, vector<1x128xf32>,
    return
  }
  func.func @transform_0(%arg0: i32) -> (i32, i32) {
    %c0_i32 = arith.constant 0 : i32
    %c0_i32_0 = arith.constant 0 : i32
    return %arg0, %c0_i32 : i32, i32
  }
  func.func @transform_1(%arg0: i32) -> (i32, i32) {
    %c0_i32 = arith.constant 0 : i32
    %c0_i32_0 = arith.constant 0 : i32
    %c0_i32_1 = arith.constant 0 : i32
    return %c0_i32, %c0_i32_0 : i32, i32
  }
  func.func @transform_2(%arg0: i32) -> (i32, i32) {
    %c0_i32 = arith.constant 0 : i32
    %c0_i32_0 = arith.constant 0 : i32
    %c0_i32_1 = arith.constant 0 : i32
    return %c0_i32, %c0_i32_0 : i32, i32
  }
  func.func @transform_3(%arg0: i32) -> (i32, i32) {
    %c0_i32 = arith.constant 0 : i32
    %c0_i32_0 = arith.constant 0 : i32
    return %arg0, %c0_i32 : i32, i32
  }
}

</mosaic_0001>

<llo_original>
// kernel: tpu_custom_call.1
$region0: #{tpu_custom_call.1}
  #allocation0 [shape = 'u32[]', space=smem, size = 0x4, offset = 0x4, fixed_abs, tag = 'smem constant byte address 0x4 - core index']
  #allocation1 [shape = 'u32[144,128]{1,0:T(1,128)}', space=vmem, size = 0x12000, scoped, tag = 'internal scratch']
  %s0 = inlined_call_operand.hbm [shape: f32[1,896], index: 0, kind: input, shape index: {}]
  %s1 = inlined_call_operand.hbm [shape: bf16[896,128], index: 1, kind: input, shape index: {}]
  %s2 = inlined_call_operand.vmem [shape: f32[1,128], index: 2, kind: input, shape index: {}]
  %s3 = inlined_call_operand.hbm [shape: f32[1,128], index: 3, kind: output, shape index: {}]
  %s4 = sld [smem:[#allocation0]]
  $region30: #{tpu_custom_call.1} parent=0
    _
  %s6 = ssub.s32 1, %s4
  %s7 = scalar_select 0, %s6, %s4
  $region1: #{tpu_custom_call.1} parent=0
    #allocation2 [shape = 'u8[3584]{0}', space=vmem, size = 0x1000, scoped, tag = 'input window, operand 0, single buffered']
    #allocation3 [shape = 's32[1]{0}', space=sflag, size = 0x4, scoped, tag = 'scoped memory for tpu_custom_call.1']
    #allocation4 [shape = 's32[1]{0}', space=sflag, size = 0x4, scoped, tag = 'scoped memory for tpu_custom_call.1']
    #allocation5 [shape = 'u8[229376]{0}', space=vmem, size = 0x38000, scoped, tag = 'input window, operand 1, single buffered']
    #allocation6 [shape = 's32[1]{0}', space=sflag, size = 0x4, scoped, tag = 'scoped memory for tpu_custom_call.1']
    #allocation7 [shape = 'u8[512]{0}', space=vmem, size = 0x400, scoped, tag = 'output window, operand 0, single buffered']
    %8 = vsyncpa [#allocation3], 0
    %9 = vsyncpa [#allocation6], 0
    %10 = vsyncpa [#allocation4], 0
    // Predicated region
    $region2: #{tpu_custom_call.1} parent=1 // pred_check
      _
    $region3: #{tpu_custom_call.1} parent=1 // pred_check_branch
      %12 = sbr.rel (0) target = $region5
    $region4: #{tpu_custom_call.1} parent=1 // pred_region
      %s14 = ssub.s32 112, 112
      %15 = vsyncadd [#allocation3], %s14
      %s17 = sshll.u32 [#allocation2], 4
      %s18 = int_to_ptr.vmem [resolvable:$true] %s17
      %20 = dma.hbm_to_vmem [thread:$0]  %s0, 112, %s18, [#allocation3]
    $region5: #{tpu_custom_call.1} parent=1 // pred_fallthru
      _
    // Predicated region
    $region6: #{tpu_custom_call.1} parent=1 // pred_check
      _
    $region7: #{tpu_custom_call.1} parent=1 // pred_check_branch
      %22 = sbr.rel (0) target = $region9
    $region8: #{tpu_custom_call.1} parent=1 // pred_region
      %s24 = ssub.s32 7168, 7168
      %25 = vsyncadd [#allocation6], %s24
      %s26 = sshll.u32 [#allocation5], 4
      %s27 = int_to_ptr.vmem [resolvable:$true] %s26
      %32 = dma.hbm_to_vmem [thread:$0]  %s1, 7168, %s27, [#allocation6], 64, 64, 4
    $region9: #{tpu_custom_call.1} parent=1 // pred_fallthru
      _
    // Predicated region
    $region10: #{tpu_custom_call.1} parent=1 // pred_check
      _
    $region11: #{tpu_custom_call.1} parent=1 // pred_check_branch
      %34 = sbr.rel (0) target = $region13
    $region12: #{tpu_custom_call.1} parent=1 // pred_region
      _
    $region13: #{tpu_custom_call.1} parent=1 // pred_fallthru
      _
    // Predicated region
    $region14: #{tpu_custom_call.1} parent=1 // pred_check
      _
    $region15: #{tpu_custom_call.1} parent=1 // pred_check_branch
      %36 = sbr.rel (0) target = $region17
    $region16: #{tpu_custom_call.1} parent=1 // pred_region
      %37 = dma.done [#allocation3], 112
    $region17: #{tpu_custom_call.1} parent=1 // pred_fallthru
      _
    // Predicated region
    $region18: #{tpu_custom_call.1} parent=1 // pred_check
      _
    $region19: #{tpu_custom_call.1} parent=1 // pred_check_branch
      %39 = sbr.rel (0) target = $region21
    $region20: #{tpu_custom_call.1} parent=1 // pred_region
      %40 = dma.done [#allocation6], 7168
    $region21: #{tpu_custom_call.1} parent=1 // pred_fallthru
      _
    %v42 = vld [vmem:[#allocation2] sm:$0xff]
    %v44 = vlaneseq
    %v45 = vshrl.u32 %v44, 7
    %v46 = vsub.s32 0, %v45
    %v47 = vrot.slane %v42, %v46
    %v48 = vlaneseq
    %v49 = vshrl.u32 %v48, 7
    %v50 = vsub.s32 1, %v49
    %v51 = vrot.slane %v42, %v50
    %v52 = vlaneseq
    %v53 = vshrl.u32 %v52, 7
    %v54 = vsub.s32 2, %v53
    %v55 = vrot.slane %v42, %v54
    %v56 = vlaneseq
    %v57 = vshrl.u32 %v56, 7
    %v58 = vsub.s32 3, %v57
    %v59 = vrot.slane %v42, %v58
    %v60 = vlaneseq
    %v61 = vshrl.u32 %v60, 7
    %v62 = vsub.s32 4, %v61
    %v63 = vrot.slane %v42, %v62
    %v64 = vlaneseq
    %v65 = vshrl.u32 %v64, 7
    %v66 = vsub.s32 5, %v65
    %v67 = vrot.slane %v42, %v66
    %v68 = vlaneseq
    %v69 = vshrl.u32 %v68, 7
    %v70 = vsub.s32 6, %v69
    %v71 = vrot.slane %v42, %v70
    %v79 = vpack.c.bf16 %v47, %v47
    %v80 = vpack.c.bf16 %v51, %v51
    %v81 = vpack.c.bf16 %v55, %v55
    %v82 = vpack.c.bf16 %v59, %v59
    %v83 = vpack.c.bf16 %v63, %v63
    %v84 = vpack.c.bf16 %v67, %v67
    %v85 = vpack.c.bf16 %v71, %v71
    %v86 = vld [vmem:[#allocation5] sm:$0xf]
    %v87 = vld [vmem:[#allocation5 + $0x4] sm:$0xf]
    %v88 = vld [vmem:[#allocation5 + $0x8] sm:$0xf]
    %v89 = vld [vmem:[#allocation5 + $0xc] sm:$0xf]
    %v90 = vld [vmem:[#allocation5 + $0x10] sm:$0xf]
    %v91 = vld [vmem:[#allocation5 + $0x14] sm:$0xf]
    %v92 = vld [vmem:[#allocation5 + $0x18] sm:$0xf]
    %v93 = vld [vmem:[#allocation5 + $0x1c] sm:$0xf]
    %v94 = vld [vmem:[#allocation5 + $0x20] sm:$0xf]
    %v95 = vld [vmem:[#allocation5 + $0x24] sm:$0xf]
    %v96 = vld [vmem:[#allocation5 + $0x28] sm:$0xf]
    %v97 = vld [vmem:[#allocation5 + $0x2c] sm:$0xf]
    %v98 = vld [vmem:[#allocation5 + $0x30] sm:$0xf]
    %v99 = vld [vmem:[#allocation5 + $0x34] sm:$0xf]
    %v100 = vld [vmem:[#allocation5 + $0x38] sm:$0xf]
    %v101 = vld [vmem:[#allocation5 + $0x3c] sm:$0xf]
    %v102 = vld [vmem:[#allocation5 + $0x40] sm:$0xf]
    %v103 = vld [vmem:[#allocation5 + $0x44] sm:$0xf]
    %v104 = vld [vmem:[#allocation5 + $0x48] sm:$0xf]
    %v105 = vld [vmem:[#allocation5 + $0x4c] sm:$0xf]
    %v106 = vld [vmem:[#allocation5 + $0x50] sm:$0xf]
    %v107 = vld [vmem:[#allocation5 + $0x54] sm:$0xf]
    %v108 = vld [vmem:[#allocation5 + $0x58] sm:$0xf]
    %v109 = vld [vmem:[#allocation5 + $0x5c] sm:$0xf]
    %v110 = vld [vmem:[#allocation5 + $0x60] sm:$0xf]
    %v111 = vld [vmem:[#allocation5 + $0x64] sm:$0xf]
    %v112 = vld [vmem:[#allocation5 + $0x68] sm:$0xf]
    %v113 = vld [vmem:[#allocation5 + $0x6c] sm:$0xf]
    %v114 = vld [vmem:[#allocation5 + $0x70] sm:$0xf]
    %v115 = vld [vmem:[#allocation5 + $0x74] sm:$0xf]
    %v116 = vld [vmem:[#allocation5 + $0x78] sm:$0xf]
    %v117 = vld [vmem:[#allocation5 + $0x7c] sm:$0xf]
    %v118 = vld [vmem:[#allocation5 + $0x80] sm:$0xf]
    %v119 = vld [vmem:[#allocation5 + $0x84] sm:$0xf]
    %v120 = vld [vmem:[#allocation5 + $0x88] sm:$0xf]
    %v121 = vld [vmem:[#allocation5 + $0x8c] sm:$0xf]
    %v122 = vld [vmem:[#allocation5 + $0x90] sm:$0xf]
    %v123 = vld [vmem:[#allocation5 + $0x94] sm:$0xf]
    %v124 = vld [vmem:[#allocation5 + $0x98] sm:$0xf]
    %v125 = vld [vmem:[#allocation5 + $0x9c] sm:$0xf]
    %v126 = vld [vmem:[#allocation5 + $0xa0] sm:$0xf]
    %v127 = vld [vmem:[#allocation5 + $0xa4] sm:$0xf]
    %v128 = vld [vmem:[#allocation5 + $0xa8] sm:$0xf]
    %v129 = vld [vmem:[#allocation5 + $0xac] sm:$0xf]
    %v130 = vld [vmem:[#allocation5 + $0xb0] sm:$0xf]
    %v131 = vld [vmem:[#allocation5 + $0xb4] sm:$0xf]
    %v132 = vld [vmem:[#allocation5 + $0xb8] sm:$0xf]
    %v133 = vld [vmem:[#allocation5 + $0xbc] sm:$0xf]
    %v134 = vld [vmem:[#allocation5 + $0xc0] sm:$0xf]
    %v135 = vld [vmem:[#allocation5 + $0xc4] sm:$0xf]
    %v136 = vld [vmem:[#allocation5 + $0xc8] sm:$0xf]
    %v137 = vld [vmem:[#allocation5 + $0xcc] sm:$0xf]
    %v138 = vld [vmem:[#allocation5 + $0xd0] sm:$0xf]
    %v139 = vld [vmem:[#allocation5 + $0xd4] sm:$0xf]
    %v140 = vld [vmem:[#allocation5 + $0xd8] sm:$0xf]
    %v141 = vld [vmem:[#allocation5 + $0xdc] sm:$0xf]
    %v142 = vld [vmem:[#allocation5 + $0xe0] sm:$0xf]
    %v143 = vld [vmem:[#allocation5 + $0xe4] sm:$0xf]
    %v144 = vld [vmem:[#allocation5 + $0xe8] sm:$0xf]
    %v145 = vld [vmem:[#allocation5 + $0xec] sm:$0xf]
    %v146 = vld [vmem:[#allocation5 + $0xf0] sm:$0xf]
    %v147 = vld [vmem:[#allocation5 + $0xf4] sm:$0xf]
    %v148 = vld [vmem:[#allocation5 + $0xf8] sm:$0xf]
    %v149 = vld [vmem:[#allocation5 + $0xfc] sm:$0xf]
    %v150 = vld [vmem:[#allocation5 + $0x100] sm:$0xf]
    %v151 = vld [vmem:[#allocation5 + $0x104] sm:$0xf]
    %v152 = vld [vmem:[#allocation5 + $0x108] sm:$0xf]
    %v153 = vld [vmem:[#allocation5 + $0x10c] sm:$0xf]
    %v154 = vld [vmem:[#allocation5 + $0x110] sm:$0xf]
    %v155 = vld [vmem:[#allocation5 + $0x114] sm:$0xf]
    %v156 = vld [vmem:[#allocation5 + $0x118] sm:$0xf]
    %v157 = vld [vmem:[#allocation5 + $0x11c] sm:$0xf]
    %v158 = vld [vmem:[#allocation5 + $0x120] sm:$0xf]
    %v159 = vld [vmem:[#allocation5 + $0x124] sm:$0xf]
    %v160 = vld [vmem:[#allocation5 + $0x128] sm:$0xf]
    %v161 = vld [vmem:[#allocation5 + $0x12c] sm:$0xf]
    %v162 = vld [vmem:[#allocation5 + $0x130] sm:$0xf]
    %v163 = vld [vmem:[#allocation5 + $0x134] sm:$0xf]
    %v164 = vld [vmem:[#allocation5 + $0x138] sm:$0xf]
    %v165 = vld [vmem:[#allocation5 + $0x13c] sm:$0xf]
    %v166 = vld [vmem:[#allocation5 + $0x140] sm:$0xf]
    %v167 = vld [vmem:[#allocation5 + $0x144] sm:$0xf]
    %v168 = vld [vmem:[#allocation5 + $0x148] sm:$0xf]
    %v169 = vld [vmem:[#allocation5 + $0x14c] sm:$0xf]
    %v170 = vld [vmem:[#allocation5 + $0x150] sm:$0xf]
    %v171 = vld [vmem:[#allocation5 + $0x154] sm:$0xf]
    %v172 = vld [vmem:[#allocation5 + $0x158] sm:$0xf]
    %v173 = vld [vmem:[#allocation5 + $0x15c] sm:$0xf]
    %v174 = vld [vmem:[#allocation5 + $0x160] sm:$0xf]
    %v175 = vld [vmem:[#allocation5 + $0x164] sm:$0xf]
    %v176 = vld [vmem:[#allocation5 + $0x168] sm:$0xf]
    %v177 = vld [vmem:[#allocation5 + $0x16c] sm:$0xf]
    %v178 = vld [vmem:[#allocation5 + $0x170] sm:$0xf]
    %v179 = vld [vmem:[#allocation5 + $0x174] sm:$0xf]
    %v180 = vld [vmem:[#allocation5 + $0x178] sm:$0xf]
    %v181 = vld [vmem:[#allocation5 + $0x17c] sm:$0xf]
    %v182 = vld [vmem:[#allocation5 + $0x180] sm:$0xf]
    %v183 = vld [vmem:[#allocation5 + $0x184] sm:$0xf]
    %v184 = vld [vmem:[#allocation5 + $0x188] sm:$0xf]
    %v185 = vld [vmem:[#allocation5 + $0x18c] sm:$0xf]
    %v186 = vld [vmem:[#allocation5 + $0x190] sm:$0xf]
    %v187 = vld [vmem:[#allocation5 + $0x194] sm:$0xf]
    %v188 = vld [vmem:[#allocation5 + $0x198] sm:$0xf]
    %v189 = vld [vmem:[#allocation5 + $0x19c] sm:$0xf]
    %v190 = vld [vmem:[#allocation5 + $0x1a0] sm:$0xf]
    %v191 = vld [vmem:[#allocation5 + $0x1a4] sm:$0xf]
    %v192 = vld [vmem:[#allocation5 + $0x1a8] sm:$0xf]
    %v193 = vld [vmem:[#allocation5 + $0x1ac] sm:$0xf]
    %v194 = vld [vmem:[#allocation5 + $0x1b0] sm:$0xf]
    %v195 = vld [vmem:[#allocation5 + $0x1b4] sm:$0xf]
    %v196 = vld [vmem:[#allocation5 + $0x1b8] sm:$0xf]
    %v197 = vld [vmem:[#allocation5 + $0x1bc] sm:$0xf]
    %v198 = vld [vmem:[%s2] sm:$0x1]
    %v311 = vunpack.c.l.b16 %v86
    %v312 = vunpack.c.l.b16 %v87
    %v313 = vunpack.c.l.b16 %v88
    %v314 = vunpack.c.l.b16 %v89
    %v315 = vunpack.c.l.b16 %v90
    %v316 = vunpack.c.l.b16 %v91
    %v317 = vunpack.c.l.b16 %v92
    %v318 = vunpack.c.l.b16 %v93
    %v319 = vunpack.c.l.b16 %v94
    %v320 = vunpack.c.l.b16 %v95
    %v321 = vunpack.c.l.b16 %v96
    %v322 = vunpack.c.l.b16 %v97
    %v323 = vunpack.c.l.b16 %v98
    %v324 = vunpack.c.l.b16 %v99
    %v325 = vunpack.c.l.b16 %v100
    %v326 = vunpack.c.l.b16 %v101
    %v327 = vunpack.c.l.b16 %v102
    %v328 = vunpack.c.l.b16 %v103
    %v329 = vunpack.c.l.b16 %v104
    %v330 = vunpack.c.l.b16 %v105
    %v331 = vunpack.c.l.b16 %v106
    %v332 = vunpack.c.l.b16 %v107
    %v333 = vunpack.c.l.b16 %v108
    %v334 = vunpack.c.l.b16 %v109
    %v335 = vunpack.c.l.b16 %v110
    %v336 = vunpack.c.l.b16 %v111
    %v337 = vunpack.c.l.b16 %v112
    %v338 = vunpack.c.l.b16 %v113
    %v339 = vunpack.c.l.b16 %v114
    %v340 = vunpack.c.l.b16 %v115
    %v341 = vunpack.c.l.b16 %v116
    %v342 = vunpack.c.l.b16 %v117
    %v343 = vunpack.c.l.b16 %v118
    %v344 = vunpack.c.l.b16 %v119
    %v345 = vunpack.c.l.b16 %v120
    %v346 = vunpack.c.l.b16 %v121
    %v347 = vunpack.c.l.b16 %v122
    %v348 = vunpack.c.l.b16 %v123
    %v349 = vunpack.c.l.b16 %v124
    %v350 = vunpack.c.l.b16 %v125
    %v351 = vunpack.c.l.b16 %v126
    %v352 = vunpack.c.l.b16 %v127
    %v353 = vunpack.c.l.b16 %v128
    %v354 = vunpack.c.l.b16 %v129
    %v355 = vunpack.c.l.b16 %v130
    %v356 = vunpack.c.l.b16 %v131
    %v357 = vunpack.c.l.b16 %v132
    %v358 = vunpack.c.l.b16 %v133
    %v359 = vunpack.c.l.b16 %v134
    %v360 = vunpack.c.l.b16 %v135
    %v361 = vunpack.c.l.b16 %v136
    %v362 = vunpack.c.l.b16 %v137
    %v363 = vunpack.c.l.b16 %v138
    %v364 = vunpack.c.l.b16 %v139
    %v365 = vunpack.c.l.b16 %v140
    %v366 = vunpack.c.l.b16 %v141
    %v367 = vunpack.c.l.b16 %v142
    %v368 = vunpack.c.l.b16 %v143
    %v369 = vunpack.c.l.b16 %v144
    %v370 = vunpack.c.l.b16 %v145
    %v371 = vunpack.c.l.b16 %v146
    %v372 = vunpack.c.l.b16 %v147
    %v373 = vunpack.c.l.b16 %v148
    %v374 = vunpack.c.l.b16 %v149
    %v375 = vunpack.c.l.b16 %v150
    %v376 = vunpack.c.l.b16 %v151
    %v377 = vunpack.c.l.b16 %v152
    %v378 = vunpack.c.l.b16 %v153
    %v379 = vunpack.c.l.b16 %v154
    %v380 = vunpack.c.l.b16 %v155
    %v381 = vunpack.c.l.b16 %v156
    %v382 = vunpack.c.l.b16 %v157
    %v383 = vunpack.c.l.b16 %v158
    %v384 = vunpack.c.l.b16 %v159
    %v385 = vunpack.c.l.b16 %v160
    %v386 = vunpack.c.l.b16 %v161
    %v387 = vunpack.c.l.b16 %v162
    %v388 = vunpack.c.l.b16 %v163
    %v389 = vunpack.c.l.b16 %v164
    %v390 = vunpack.c.l.b16 %v165
    %v391 = vunpack.c.l.b16 %v166
    %v392 = vunpack.c.l.b16 %v167
    %v393 = vunpack.c.l.b16 %v168
    %v394 = vunpack.c.l.b16 %v169
    %v395 = vunpack.c.l.b16 %v170
    %v396 = vunpack.c.l.b16 %v171
    %v397 = vunpack.c.l.b16 %v172
    %v398 = vunpack.c.l.b16 %v173
    %v399 = vunpack.c.l.b16 %v174
    %v400 = vunpack.c.l.b16 %v175
    %v401 = vunpack.c.l.b16 %v176
    %v402 = vunpack.c.l.b16 %v177
    %v403 = vunpack.c.l.b16 %v178
    %v404 = vunpack.c.l.b16 %v179
    %v405 = vunpack.c.l.b16 %v180
    %v406 = vunpack.c.l.b16 %v181
    %v407 = vunpack.c.l.b16 %v182
    %v408 = vunpack.c.l.b16 %v183
    %v409 = vunpack.c.l.b16 %v184
    %v410 = vunpack.c.l.b16 %v185
    %v411 = vunpack.c.l.b16 %v186
    %v412 = vunpack.c.l.b16 %v187
    %v413 = vunpack.c.l.b16 %v188
    %v414 = vunpack.c.l.b16 %v189
    %v415 = vunpack.c.l.b16 %v190
    %v416 = vunpack.c.l.b16 %v191
    %v417 = vunpack.c.l.b16 %v192
    %v418 = vunpack.c.l.b16 %v193
    %v419 = vunpack.c.l.b16 %v194
    %v420 = vunpack.c.l.b16 %v195
    %v421 = vunpack.c.l.b16 %v196
    %v422 = vunpack.c.l.b16 %v197
    %v423 = vpack.c.b16 %v312, %v311
    %v424 = vpack.c.b16 %v314, %v313
    %v425 = vpack.c.b16 %v316, %v315
    %v426 = vpack.c.b16 %v318, %v317
    %v427 = vpack.c.b16 %v320, %v319
    %v428 = vpack.c.b16 %v322, %v321
    %v429 = vpack.c.b16 %v324, %v323
    %v430 = vpack.c.b16 %v326, %v325
    %v431 = vpack.c.b16 %v328, %v327
    %v432 = vpack.c.b16 %v330, %v329
    %v433 = vpack.c.b16 %v332, %v331
    %v434 = vpack.c.b16 %v334, %v333
    %v435 = vpack.c.b16 %v336, %v335
    %v436 = vpack.c.b16 %v338, %v337
    %v437 = vpack.c.b16 %v340, %v339
    %v438 = vpack.c.b16 %v342, %v341
    %v439 = vpack.c.b16 %v344, %v343
    %v440 = vpack.c.b16 %v346, %v345
    %v441 = vpack.c.b16 %v348, %v347
    %v442 = vpack.c.b16 %v350, %v349
    %v443 = vpack.c.b16 %v352, %v351
    %v444 = vpack.c.b16 %v354, %v353
    %v445 = vpack.c.b16 %v356, %v355
    %v446 = vpack.c.b16 %v358, %v357
    %v447 = vpack.c.b16 %v360, %v359
    %v448 = vpack.c.b16 %v362, %v361
    %v449 = vpack.c.b16 %v364, %v363
    %v450 = vpack.c.b16 %v366, %v365
    %v451 = vpack.c.b16 %v368, %v367
    %v452 = vpack.c.b16 %v370, %v369
    %v453 = vpack.c.b16 %v372, %v371
    %v454 = vpack.c.b16 %v374, %v373
    %v455 = vpack.c.b16 %v376, %v375
    %v456 = vpack.c.b16 %v378, %v377
    %v457 = vpack.c.b16 %v380, %v379
    %v458 = vpack.c.b16 %v382, %v381
    %v459 = vpack.c.b16 %v384, %v383
    %v460 = vpack.c.b16 %v386, %v385
    %v461 = vpack.c.b16 %v388, %v387
    %v462 = vpack.c.b16 %v390, %v389
    %v463 = vpack.c.b16 %v392, %v391
    %v464 = vpack.c.b16 %v394, %v393
    %v465 = vpack.c.b16 %v396, %v395
    %v466 = vpack.c.b16 %v398, %v397
    %v467 = vpack.c.b16 %v400, %v399
    %v468 = vpack.c.b16 %v402, %v401
    %v469 = vpack.c.b16 %v404, %v403
    %v470 = vpack.c.b16 %v406, %v405
    %v471 = vpack.c.b16 %v408, %v407
    %v472 = vpack.c.b16 %v410, %v409
    %v473 = vpack.c.b16 %v412, %v411
    %v474 = vpack.c.b16 %v414, %v413
    %v475 = vpack.c.b16 %v416, %v415
    %v476 = vpack.c.b16 %v418, %v417
    %v477 = vpack.c.b16 %v420, %v419
    %v478 = vpack.c.b16 %v422, %v421
    %535 = vmatprep.subr.bf16.mxu0 0
    %536 = vmatpush1.bf16.msra.mxu0 %v423
    %537 = vmatprep.subr.bf16.mxu0 0
    %538 = vmatpush1.bf16.msra.mxu0 %v424
    %539 = vmatprep.subr.bf16.mxu0 0
    %540 = vmatpush1.bf16.msra.mxu0 %v425
    %541 = vmatprep.subr.bf16.mxu0 0
    %542 = vmatpush1.bf16.msra.mxu0 %v426
    %543 = vmatprep.subr.bf16.mxu0 0
    %544 = vmatpush1.bf16.msra.mxu0 %v427
    %545 = vmatprep.subr.bf16.mxu0 0
    %546 = vmatpush1.bf16.msra.mxu0 %v428
    %547 = vmatprep.subr.bf16.mxu0 0
    %548 = vmatpush1.bf16.msra.mxu0 %v429
    %549 = vmatprep.subr.bf16.mxu0 0
    %550 = vmatpush1.bf16.msra.mxu0 %v430
    %551 = vmatprep.subr.bf16.mxu0 0
    %552 = vmatpush1.bf16.msra.mxu0 %v431
    %553 = vmatprep.subr.bf16.mxu0 0
    %554 = vmatpush1.bf16.msra.mxu0 %v432
    %555 = vmatprep.subr.bf16.mxu0 0
    %556 = vmatpush1.bf16.msra.mxu0 %v433
    %557 = vmatprep.subr.bf16.mxu0 0
    %558 = vmatpush1.bf16.msra.mxu0 %v434
    %559 = vmatprep.subr.bf16.mxu0 0
    %560 = vmatpush1.bf16.msra.mxu0 %v435
    %561 = vmatprep.subr.bf16.mxu0 0
    %562 = vmatpush1.bf16.msra.mxu0 %v436
    %563 = vmatprep.subr.bf16.mxu0 0
    %564 = vmatpush1.bf16.msra.mxu0 %v437
    %565 = vmatprep.subr.bf16.mxu0 0
    %566 = vmatpush1.bf16.msra.mxu0 %v438
    %567 = vmatprep.mubr.bf16.mxu0 %v80
    %568 = vmatmul.mubr.bf16.gmra.mrb[0].mxu0 %v79
    %v569 = vpop.f32.mrb[0].mxu0
    %v570 = vadd.f32 %v198, %v569
    %v571 = vpop.f32.mrb[0].mxu0
    %v572 = vpop.f32.mrb[0].mxu0
    %v573 = vpop.f32.mrb[0].mxu0
    %574 = vdwg.mxu0
    %575 = vmatprep.subr.bf16.mxu0 0
    %576 = vmatpush1.bf16.msra.mxu0 %v439
    %577 = vmatprep.subr.bf16.mxu0 0
    %578 = vmatpush1.bf16.msra.mxu0 %v440
    %579 = vmatprep.subr.bf16.mxu0 0
    %580 = vmatpush1.bf16.msra.mxu0 %v441
    %581 = vmatprep.subr.bf16.mxu0 0
    %582 = vmatpush1.bf16.msra.mxu0 %v442
    %583 = vmatprep.subr.bf16.mxu0 0
    %584 = vmatpush1.bf16.msra.mxu0 %v443
    %585 = vmatprep.subr.bf16.mxu0 0
    %586 = vmatpush1.bf16.msra.mxu0 %v444
    %587 = vmatprep.subr.bf16.mxu0 0
    %588 = vmatpush1.bf16.msra.mxu0 %v445
    %589 = vmatprep.subr.bf16.mxu0 0
    %590 = vmatpush1.bf16.msra.mxu0 %v446
    %591 = vmatprep.subr.bf16.mxu0 0
    %592 = vmatpush1.bf16.msra.mxu0 %v447
    %593 = vmatprep.subr.bf16.mxu0 0
    %594 = vmatpush1.bf16.msra.mxu0 %v448
    %595 = vmatprep.subr.bf16.mxu0 0
    %596 = vmatpush1.bf16.msra.mxu0 %v449
    %597 = vmatprep.subr.bf16.mxu0 0
    %598 = vmatpush1.bf16.msra.mxu0 %v450
    %599 = vmatprep.subr.bf16.mxu0 0
    %600 = vmatpush1.bf16.msra.mxu0 %v451
    %601 = vmatprep.subr.bf16.mxu0 0
    %602 = vmatpush1.bf16.msra.mxu0 %v452
    %603 = vmatprep.subr.bf16.mxu0 0
    %604 = vmatpush1.bf16.msra.mxu0 %v453
    %605 = vmatprep.subr.bf16.mxu0 0
    %606 = vmatpush1.bf16.msra.mxu0 %v454
    %607 = vmatprep.mubr.bf16.mxu0 %v82
    %608 = vmatmul.mubr.bf16.gmra.mrb[0].mxu0 %v81
    %v609 = vpop.f32.mrb[0].mxu0
    %v610 = vadd.f32 %v570, %v609
    %v611 = vpop.f32.mrb[0].mxu0
    %v612 = vpop.f32.mrb[0].mxu0
    %v613 = vpop.f32.mrb[0].mxu0
    %614 = vdwg.mxu0
    %615 = vmatprep.subr.bf16.mxu0 0
    %616 = vmatpush1.bf16.msra.mxu0 %v455
    %617 = vmatprep.subr.bf16.mxu0 0
    %618 = vmatpush1.bf16.msra.mxu0 %v456
    %619 = vmatprep.subr.bf16.mxu0 0
    %620 = vmatpush1.bf16.msra.mxu0 %v457
    %621 = vmatprep.subr.bf16.mxu0 0
    %622 = vmatpush1.bf16.msra.mxu0 %v458
    %623 = vmatprep.subr.bf16.mxu0 0
    %624 = vmatpush1.bf16.msra.mxu0 %v459
    %625 = vmatprep.subr.bf16.mxu0 0
    %626 = vmatpush1.bf16.msra.mxu0 %v460
    %627 = vmatprep.subr.bf16.mxu0 0
    %628 = vmatpush1.bf16.msra.mxu0 %v461
    %629 = vmatprep.subr.bf16.mxu0 0
    %630 = vmatpush1.bf16.msra.mxu0 %v462
    %631 = vmatprep.subr.bf16.mxu0 0
    %632 = vmatpush1.bf16.msra.mxu0 %v463
    %633 = vmatprep.subr.bf16.mxu0 0
    %634 = vmatpush1.bf16.msra.mxu0 %v464
    %635 = vmatprep.subr.bf16.mxu0 0
    %636 = vmatpush1.bf16.msra.mxu0 %v465
    %637 = vmatprep.subr.bf16.mxu0 0
    %638 = vmatpush1.bf16.msra.mxu0 %v466
    %639 = vmatprep.subr.bf16.mxu0 0
    %640 = vmatpush1.bf16.msra.mxu0 %v467
    %641 = vmatprep.subr.bf16.mxu0 0
    %642 = vmatpush1.bf16.msra.mxu0 %v468
    %643 = vmatprep.subr.bf16.mxu0 0
    %644 = vmatpush1.bf16.msra.mxu0 %v469
    %645 = vmatprep.subr.bf16.mxu0 0
    %646 = vmatpush1.bf16.msra.mxu0 %v470
    %647 = vmatprep.mubr.bf16.mxu0 %v84
    %648 = vmatmul.mubr.bf16.gmra.mrb[0].mxu0 %v83
    %v649 = vpop.f32.mrb[0].mxu0
    %v650 = vadd.f32 %v610, %v649
    %v651 = vpop.f32.mrb[0].mxu0
    %v652 = vpop.f32.mrb[0].mxu0
    %v653 = vpop.f32.mrb[0].mxu0
    %654 = vdwg.mxu0
    %655 = vmatprep.subr.bf16.mxu0 0
    %656 = vmatpush1.bf16.msra.mxu0 %v471
    %657 = vmatprep.subr.bf16.mxu0 0
    %658 = vmatpush1.bf16.msra.mxu0 %v472
    %659 = vmatprep.subr.bf16.mxu0 0
    %660 = vmatpush1.bf16.msra.mxu0 %v473
    %661 = vmatprep.subr.bf16.mxu0 0
    %662 = vmatpush1.bf16.msra.mxu0 %v474
    %663 = vmatprep.subr.bf16.mxu0 0
    %664 = vmatpush1.bf16.msra.mxu0 %v475
    %665 = vmatprep.subr.bf16.mxu0 0
    %666 = vmatpush1.bf16.msra.mxu0 %v476
    %667 = vmatprep.subr.bf16.mxu0 0
    %668 = vmatpush1.bf16.msra.mxu0 %v477
    %669 = vmatprep.subr.bf16.mxu0 0
    %670 = vmatpush1.bf16.msra.mxu0 %v478
    %671 = vmatprep.subr.bf16.mxu0 0
    %672 = vmatpush1.bf16.msra.mxu0 0
    %673 = vmatprep.subr.bf16.mxu0 0
    %674 = vmatpush1.bf16.msra.mxu0 0
    %675 = vmatprep.subr.bf16.mxu0 0
    %676 = vmatpush1.bf16.msra.mxu0 0
    %677 = vmatprep.subr.bf16.mxu0 0
    %678 = vmatpush1.bf16.msra.mxu0 0
    %679 = vmatprep.subr.bf16.mxu0 0
    %680 = vmatpush1.bf16.msra.mxu0 0
    %681 = vmatprep.subr.bf16.mxu0 0
    %682 = vmatpush1.bf16.msra.mxu0 0
    %683 = vmatprep.subr.bf16.mxu0 0
    %684 = vmatpush1.bf16.msra.mxu0 0
    %685 = vmatprep.subr.bf16.mxu0 0
    %686 = vmatpush1.bf16.msra.mxu0 0
    %687 = vmatprep.mubr.bf16.mxu0 0
    %688 = vmatmul.mubr.bf16.gmra.mrb[0].mxu0 %v85
    %v689 = vpop.f32.mrb[0].mxu0
    %v690 = vadd.f32 %v650, %v689
    %v691 = vpop.f32.mrb[0].mxu0
    %v692 = vpop.f32.mrb[0].mxu0
    %v693 = vpop.f32.mrb[0].mxu0
    %694 = vdwg.mxu0
    %v695 = vmax.f32 %v690, 0.0
    %v696 = vmin.f32 %v695, 0.5
    %697 = vst [vmem:[#allocation7] sm:$0x1] %v696
    // Predicated region
    $region22: #{tpu_custom_call.1} parent=1 // pred_check
      _
    $region23: #{tpu_custom_call.1} parent=1 // pred_check_branch
      %699 = sbr.rel (0) target = $region25
    $region24: #{tpu_custom_call.1} parent=1 // pred_region
      %s701 = ssub.s32 16, 16
      %702 = vsyncadd [#allocation4], %s701
      %s704 = sshll.u32 [#allocation7], 4
      %s705 = int_to_ptr.vmem [resolvable:$true] %s704
      %707 = dma.vmem_to_hbm [thread:$0]  %s705, 16, %s3, [#allocation4]
    $region25: #{tpu_custom_call.1} parent=1 // pred_fallthru
      _
    // Predicated region
    $region26: #{tpu_custom_call.1} parent=1 // pred_check
      _
    $region27: #{tpu_custom_call.1} parent=1 // pred_check_branch
      %709 = sbr.rel (0) target = $region29
    $region28: #{tpu_custom_call.1} parent=1 // pred_region
      %710 = dma.done [#allocation4], 16
    $region29: #{tpu_custom_call.1} parent=1 // pred_fallthru
      _
    %711 = vsyncpa [#allocation3], 1
    %712 = vsyncpa [#allocation6], 1
    %713 = vsyncpa [#allocation4], 1

</llo_original>
